<compile_context>
chip_gen: v7x
topology: tpu7x:2x2x1
jax: 0.10.0
libtpu: 0.0.40
codegen_flags: <defaults>
</compile_context>

<pallas_src>
import functools

import jax
import jax.numpy as jnp
from jax import lax
from jax.experimental import pallas as pl
from jax.experimental.pallas import tpu as pltpu

LSTM_OUT = 64     # lstm_output_size (per-frame feature size fed to each head)
HIDDEN = 32       # MLP3 hidden_size
N_HEADS = 4
EPS = 1e-5        # BatchNorm1d eps


# ---------------------------------------------------------------------------
# Kernel
# ---------------------------------------------------------------------------
def reward_predictor_kernel(
    x_ref,      # (B*F, 64)            all frames of all batch rows
    avg_ref,    # (B*F, B*F)           frame-block batch-averaging matrix
    w1_ref,     # (64, 128)            4 heads' first Linear, concat on lanes
    p1_ref,     # (3, 128)             rows: [bias1, gamma1, beta1]
    w2_ref,     # (128, 128)           block-diagonal per-head second Linear
    p2_ref,     # (3, 128)             rows: [bias2, gamma2, beta2]
    w3_ref,     # (128, 4)             per-head read-out columns
    b3_ref,     # (1, 4)
    out_ref,    # (B*F, 4)
):
    f32 = jnp.float32
    x = x_ref[...].astype(f32)
    avg = avg_ref[...]

    def fused_layer(v, w_ref, p_ref):
        # Linear (all heads at once) + per-frame BatchNorm1d (training mode,
        # batch statistics via the averaging matmul) + affine + ReLU.
        p = p_ref[...]
        bias, gamma, beta = p[0:1, :], p[1:2, :], p[2:3, :]
        h = jnp.dot(v, w_ref[...], preferred_element_type=f32) + bias
        mu = jnp.dot(avg, h, preferred_element_type=f32)          # per-frame mean
        d = h - mu
        var = jnp.dot(avg, d * d, preferred_element_type=f32)     # biased variance
        hn = d * lax.rsqrt(var + EPS) * gamma + beta
        return jnp.maximum(hn, 0.0)

    h = fused_layer(x, w1_ref, p1_ref)
    h = fused_layer(h, w2_ref, p2_ref)
    logits = jnp.dot(h, w3_ref[...], preferred_element_type=f32) + b3_ref[...]
    out_ref[...] = jax.nn.sigmoid(logits).astype(out_ref.dtype)


# ---------------------------------------------------------------------------
# Parameters (per-head, PyTorch-equivalent shapes, weights stored as (in, out))
# ---------------------------------------------------------------------------
def init_params(key, n_heads=N_HEADS, in_dim=LSTM_OUT, hidden=HIDDEN):
    heads = []
    for h in range(n_heads):
        ks = jax.random.split(jax.random.fold_in(key, h), 8)
        w = lambda k, shape, s=0.2: (s * jax.random.normal(k, shape)).astype(jnp.float32)
        heads.append({
            "w1": w(ks[0], (in_dim, hidden)),
            "b1": w(ks[1], (hidden,), 0.05),
            "g1": 1.0 + w(ks[2], (hidden,), 0.1),   # BN affine (gamma)
            "be1": w(ks[3], (hidden,), 0.05),       # BN affine (beta)
            "w2": w(ks[4], (hidden, hidden)),
            "b2": w(ks[5], (hidden,), 0.05),
            "g2": 1.0 + w(ks[6], (hidden,), 0.1),
            "be2": w(ks[7], (hidden,), 0.05),
            "w3": w(jax.random.fold_in(ks[0], 99), (hidden, 1)),
            "b3": jnp.full((1,), 0.03, jnp.float32),
        })
    return heads


def pack_params(heads, hidden=HIDDEN):
    """Fuse the per-head MLP3 parameters into lane-filling kernel operands."""
    n = len(heads)
    f32 = jnp.float32

    w1 = jnp.concatenate([h["w1"] for h in heads], axis=1)                  # (64, n*32)
    p1 = jnp.stack([jnp.concatenate([h["b1"] for h in heads]),
                    jnp.concatenate([h["g1"] for h in heads]),
                    jnp.concatenate([h["be1"] for h in heads])], axis=0)    # (3, n*32)

    w2 = jnp.zeros((n * hidden, n * hidden), f32)                           # block diag
    for i, h in enumerate(heads):
        w2 = w2.at[i * hidden:(i + 1) * hidden, i * hidden:(i + 1) * hidden].set(h["w2"])
    p2 = jnp.stack([jnp.concatenate([h["b2"] for h in heads]),
                    jnp.concatenate([h["g2"] for h in heads]),
                    jnp.concatenate([h["be2"] for h in heads])], axis=0)    # (3, n*32)

    w3 = jnp.zeros((n * hidden, n), f32)                                    # (n*32, n)
    for i, h in enumerate(heads):
        w3 = w3.at[i * hidden:(i + 1) * hidden, i].set(h["w3"][:, 0])
    b3 = jnp.concatenate([h["b3"] for h in heads]).reshape(1, n)            # (1, n)

    return {"w1": w1, "p1": p1, "w2": w2, "p2": p2, "w3": w3, "b3": b3}


# ---------------------------------------------------------------------------
# Wrapper
# ---------------------------------------------------------------------------
@functools.partial(jax.jit, static_argnames=("n_heads",))
def reward_predictor_forward(x, packed, n_heads=N_HEADS):
    """x: (B, n_frames, LSTM_OUT) -> (B, n_frames, n_heads), float32."""
    B, F, D = x.shape
    x_flat = x.reshape(B * F, D).astype(jnp.float32)        # row b*F + f (batch-major)

    # (B*F, B*F) matrix that averages, per feature, over the B rows belonging to
    # the same frame index -> per-frame BatchNorm batch statistics via one matmul.
    frame_id = jnp.arange(B * F) % F
    avg = (frame_id[:, None] == frame_id[None, :]).astype(jnp.float32) / B

    vmem = pl.BlockSpec(memory_space=pltpu.MemorySpace.VMEM)
    args = (x_flat, avg, packed["w1"], packed["p1"],
            packed["w2"], packed["p2"], packed["w3"], packed["b3"])

    out = pl.pallas_call(
        reward_predictor_kernel,
        out_shape=jax.ShapeDtypeStruct((B * F, n_heads), jnp.float32),
        in_specs=[vmem] * len(args),
        out_specs=vmem,
    )(*args)
    # Matches torch.stack(..., dim=1).squeeze() for B>1, n_frames>1, n_heads>1.
    return out.reshape(B, F, n_heads)


# ---------------------------------------------------------------------------
# Pure-JAX reference mirroring the PyTorch loops (for verification)
# ---------------------------------------------------------------------------
def reward_predictor_reference(x, heads):
    B, F, D = x.shape

    def bn(v, g, b):
        mu = jnp.mean(v, axis=0, keepdims=True)
        var = jnp.mean((v - mu) ** 2, axis=0, keepdims=True)
        return (v - mu) / jnp.sqrt(var + EPS) * g + b

    frame_outs = []
    for f in range(F):
        xf = x[:, f, :].astype(jnp.float32)
        head_outs = []
        for hp in heads:
            h = jnp.maximum(bn(xf @ hp["w1"] + hp["b1"], hp["g1"], hp["be1"]), 0.0)
            h = jnp.maximum(bn(h @ hp["w2"] + hp["b2"], hp["g2"], hp["be2"]), 0.0)
            head_outs.append(jax.nn.sigmoid(h @ hp["w3"] + hp["b3"]))   # (B, 1)
        frame_outs.append(jnp.concatenate(head_outs, axis=1))           # (B, n_heads)
    return jnp.stack(frame_outs, axis=1)                                # (B, F, n_heads)


if __name__ == "__main__":
    key = jax.random.PRNGKey(0)
    kx, kp = jax.random.split(key)

    batch = 2
    n_frames = 8

    x = jax.random.normal(kx, (batch, n_frames, LSTM_OUT), dtype=jnp.float32)
    heads = init_params(kp)
    packed = pack_params(heads)

    out = reward_predictor_forward(x, packed)
    out = jax.block_until_ready(out)
    assert out.shape == (batch, n_frames, N_HEADS), out.shape

    ref = reward_predictor_reference(x, heads)
    assert jnp.allclose(out, ref, atol=1e-5, rtol=1e-5), "mismatch vs JAX reference"

    print("KERNEL_OK")
</pallas_src>

<mosaic_0001>
module attributes {stable_mosaic.version = 11 : i64} {
  func.func @reward_predictor_kernel(%arg0: memref<16x64xf32, #tpu.memory_space<vmem>>, %arg1: memref<16x16xf32, #tpu.memory_space<vmem>>, %arg2: memref<64x128xf32, #tpu.memory_space<vmem>>, %arg3: memref<3x128xf32, #tpu.memory_space<vmem>>, %arg4: memref<128x128xf32, #tpu.memory_space<vmem>>, %arg5: memref<3x128xf32, #tpu.memory_space<vmem>>, %arg6: memref<128x4xf32, #tpu.memory_space<vmem>>, %arg7: memref<1x4xf32, #tpu.memory_space<vmem>>, %arg8: memref<16x4xf32, #tpu.memory_space<vmem>>) attributes {dimension_semantics = [], scalar_prefetch = 0 : i64, scratch_operands = 0 : i64, tpu.core_type = #tpu.core_type<tc>} {
    %c0 = arith.constant 0 : index
    %c0_0 = arith.constant 0 : index
    %0 = vector.load %arg0[%c0, %c0_0] : memref<16x64xf32, #tpu.memory_space<vmem>>, vector<16x64xf32>
    %c0_1 = arith.constant 0 : index
    %c0_2 = arith.constant 0 : index
    %1 = vector.load %arg1[%c0_1, %c0_2] : memref<16x16xf32, #tpu.memory_space<vmem>>, vector<16x16xf32>
    %c0_3 = arith.constant 0 : index
    %c0_4 = arith.constant 0 : index
    %2 = vector.load %arg3[%c0_3, %c0_4] : memref<3x128xf32, #tpu.memory_space<vmem>>, vector<3x128xf32>
    %3 = vector.extract_strided_slice %2 {offsets = [0, 0], sizes = [1, 128], strides = [1, 1]} : vector<3x128xf32> to vector<1x128xf32>
    %4 = vector.extract_strided_slice %2 {offsets = [1, 0], sizes = [1, 128], strides = [1, 1]} : vector<3x128xf32> to vector<1x128xf32>
    %5 = vector.extract_strided_slice %2 {offsets = [2, 0], sizes = [1, 128], strides = [1, 1]} : vector<3x128xf32> to vector<1x128xf32>
    %c0_5 = arith.constant 0 : index
    %c0_6 = arith.constant 0 : index
    %6 = vector.load %arg2[%c0_5, %c0_6] : memref<64x128xf32, #tpu.memory_space<vmem>>, vector<64x128xf32>
    %cst = arith.constant dense<0.000000e+00> : vector<16x128xf32>
    %7 = tpu.matmul %0, %6, %cst {dimension_numbers = #tpu.dot_dimension_numbers<[1], [0], [0], [1], [0, 0, 1, 1], [], []>} : vector<16x64xf32>, vector<64x128xf32>, vector<16x128xf32> -> vector<16x128xf32>
    %8 = vector.broadcast %3 : vector<1x128xf32> to vector<16x128xf32>
    %9 = arith.addf %7, %8 : vector<16x128xf32>
    %cst_7 = arith.constant dense<0.000000e+00> : vector<16x128xf32>
    %10 = tpu.matmul %1, %9, %cst_7 {dimension_numbers = #tpu.dot_dimension_numbers<[1], [0], [0], [1], [0, 0, 1, 1], [], []>} : vector<16x16xf32>, vector<16x128xf32>, vector<16x128xf32> -> vector<16x128xf32>
    %11 = arith.subf %9, %10 : vector<16x128xf32>
    %12 = arith.mulf %11, %11 : vector<16x128xf32>
    %cst_8 = arith.constant dense<0.000000e+00> : vector<16x128xf32>
    %13 = tpu.matmul %1, %12, %cst_8 {dimension_numbers = #tpu.dot_dimension_numbers<[1], [0], [0], [1], [0, 0, 1, 1], [], []>} : vector<16x16xf32>, vector<16x128xf32>, vector<16x128xf32> -> vector<16x128xf32>
    %cst_9 = arith.constant 9.99999974E-6 : f32
    %14 = vector.broadcast %cst_9 : f32 to vector<16x128xf32>
    %15 = arith.addf %13, %14 : vector<16x128xf32>
    %16 = math.rsqrt %15 : vector<16x128xf32>
    %17 = arith.mulf %11, %16 : vector<16x128xf32>
    %18 = vector.broadcast %4 : vector<1x128xf32> to vector<16x128xf32>
    %19 = arith.mulf %17, %18 : vector<16x128xf32>
    %20 = vector.broadcast %5 : vector<1x128xf32> to vector<16x128xf32>
    %21 = arith.addf %19, %20 : vector<16x128xf32>
    %cst_10 = arith.constant 0.000000e+00 : f32
    %22 = vector.broadcast %cst_10 : f32 to vector<16x128xf32>
    %23 = arith.maximumf %21, %22 : vector<16x128xf32>
    %c0_11 = arith.constant 0 : index
    %c0_12 = arith.constant 0 : index
    %24 = vector.load %arg5[%c0_11, %c0_12] : memref<3x128xf32, #tpu.memory_space<vmem>>, vector<3x128xf32>
    %25 = vector.extract_strided_slice %24 {offsets = [0, 0], sizes = [1, 128], strides = [1, 1]} : vector<3x128xf32> to vector<1x128xf32>
    %26 = vector.extract_strided_slice %24 {offsets = [1, 0], sizes = [1, 128], strides = [1, 1]} : vector<3x128xf32> to vector<1x128xf32>
    %27 = vector.extract_strided_slice %24 {offsets = [2, 0], sizes = [1, 128], strides = [1, 1]} : vector<3x128xf32> to vector<1x128xf32>
    %c0_13 = arith.constant 0 : index
    %c0_14 = arith.constant 0 : index
    %28 = vector.load %arg4[%c0_13, %c0_14] : memref<128x128xf32, #tpu.memory_space<vmem>>, vector<128x128xf32>
    %cst_15 = arith.constant dense<0.000000e+00> : vector<16x128xf32>
    %29 = tpu.matmul %23, %28, %cst_15 {dimension_numbers = #tpu.dot_dimension_numbers<[1], [0], [0], [1], [0, 0, 1, 1], [], []>} : vector<16x128xf32>, vector<128x128xf32>, vector<16x128xf32> -> vector<16x128xf32>
    %30 = vector.broadcast %25 : vector<1x128xf32> to vector<16x128xf32>
    %31 = arith.addf %29, %30 : vector<16x128xf32>
    %cst_16 = arith.constant dense<0.000000e+00> : vector<16x128xf32>
    %32 = tpu.matmul %1, %31, %cst_16 {dimension_numbers = #tpu.dot_dimension_numbers<[1], [0], [0], [1], [0, 0, 1, 1], [], []>} : vector<16x16xf32>, vector<16x128xf32>, vector<16x128xf32> -> vector<16x128xf32>
    %33 = arith.subf %31, %32 : vector<16x128xf32>
    %34 = arith.mulf %33, %33 : vector<16x128xf32>
    %cst_17 = arith.constant dense<0.000000e+00> : vector<16x128xf32>
    %35 = tpu.matmul %1, %34, %cst_17 {dimension_numbers = #tpu.dot_dimension_numbers<[1], [0], [0], [1], [0, 0, 1, 1], [], []>} : vector<16x16xf32>, vector<16x128xf32>, vector<16x128xf32> -> vector<16x128xf32>
    %cst_18 = arith.constant 9.99999974E-6 : f32
    %36 = vector.broadcast %cst_18 : f32 to vector<16x128xf32>
    %37 = arith.addf %35, %36 : vector<16x128xf32>
    %38 = math.rsqrt %37 : vector<16x128xf32>
    %39 = arith.mulf %33, %38 : vector<16x128xf32>
    %40 = vector.broadcast %26 : vector<1x128xf32> to vector<16x128xf32>
    %41 = arith.mulf %39, %40 : vector<16x128xf32>
    %42 = vector.broadcast %27 : vector<1x128xf32> to vector<16x128xf32>
    %43 = arith.addf %41, %42 : vector<16x128xf32>
    %cst_19 = arith.constant 0.000000e+00 : f32
    %44 = vector.broadcast %cst_19 : f32 to vector<16x128xf32>
    %45 = arith.maximumf %43, %44 : vector<16x128xf32>
    %c0_20 = arith.constant 0 : index
    %c0_21 = arith.constant 0 : index
    %46 = vector.load %arg6[%c0_20, %c0_21] : memref<128x4xf32, #tpu.memory_space<vmem>>, vector<128x4xf32>
    %cst_22 = arith.constant dense<0.000000e+00> : vector<16x4xf32>
    %47 = tpu.matmul %45, %46, %cst_22 {dimension_numbers = #tpu.dot_dimension_numbers<[1], [0], [0], [1], [0, 0, 1, 1], [], []>} : vector<16x128xf32>, vector<128x4xf32>, vector<16x4xf32> -> vector<16x4xf32>
    %c0_23 = arith.constant 0 : index
    %c0_24 = arith.constant 0 : index
    %48 = vector.load %arg7[%c0_23, %c0_24] : memref<1x4xf32, #tpu.memory_space<vmem>>, vector<1x4xf32>
    %49 = vector.broadcast %48 : vector<1x4xf32> to vector<16x4xf32>
    %50 = arith.addf %47, %49 : vector<16x4xf32>
    %51 = arith.negf %50 : vector<16x4xf32>
    %52 = math.exp %51 : vector<16x4xf32>
    %cst_25 = arith.constant 1.000000e+00 : f32
    %53 = vector.broadcast %cst_25 : f32 to vector<16x4xf32>
    %54 = arith.addf %53, %52 : vector<16x4xf32>
    %55 = arith.divf %53, %54 : vector<16x4xf32>
    %c0_26 = arith.constant 0 : index
    %c0_27 = arith.constant 0 : index
    %56 = vector.load %arg8[%c0_26, %c0_27] : memref<16x4xf32, #tpu.memory_space<vmem>>, vector<16x4xf32>
    tpu.vector_store %arg8[%c0_26, %c0_27], %55 {strides = array<i32>} : memref<16x4xf32, #tpu.memory_space<vmem>>, vector<16x4xf32>,
    return
  }
}

</mosaic_0001>

<llo_original>
// kernel: reward_predictor_forward.1
$region0: #{reward_predictor_forward.1}
  #allocation0 [shape = 'u32[]', space=smem, size = 0x4, offset = 0x4, fixed_abs, tag = 'smem constant byte address 0x4 - core index']
  #allocation1 [shape = 'u32[144,128]{1,0:T(1,128)}', space=vmem, size = 0x12000, scoped, tag = 'internal scratch']
  %s0 = inlined_call_operand.vmem [shape: f32[16,64], index: 0, kind: input, shape index: {}]
  %s1 = inlined_call_operand.vmem [shape: f32[16,16], index: 1, kind: input, shape index: {}]
  %s2 = inlined_call_operand.hbm [shape: f32[64,128], index: 2, kind: input, shape index: {}]
  %s3 = inlined_call_operand.vmem [shape: f32[3,128], index: 3, kind: input, shape index: {}]
  %s4 = inlined_call_operand.vmem [shape: f32[128,128], index: 4, kind: input, shape index: {}]
  %s5 = inlined_call_operand.vmem [shape: f32[3,128], index: 5, kind: input, shape index: {}]
  %s6 = inlined_call_operand.vmem [shape: f32[128,4], index: 6, kind: input, shape index: {}]
  %s7 = inlined_call_operand.vmem [shape: f32[1,4], index: 7, kind: input, shape index: {}]
  %s8 = inlined_call_operand.vmem [shape: f32[16,4], index: 8, kind: output, shape index: {}]
  %s9 = sld [smem:[#allocation0]]
  $region46: #{reward_predictor_forward.1} parent=0
    _
  %s11 = ssub.s32 1, %s9
  %s12 = scalar_select 0, %s11, %s9
  $region1: #{reward_predictor_forward.1} parent=0
    #allocation2 [shape = 'u8[32768]{0}', space=vmem, size = 0x8000, scoped, tag = 'input window, operand 2, single buffered']
    #allocation3 [shape = 's32[1]{0}', space=sflag, size = 0x4, scoped, tag = 'scoped memory for reward_predictor_forward.1']
    %13 = vsyncpa [#allocation3], 0
    // Predicated region
    $region2: #{reward_predictor_forward.1} parent=1 // pred_check
      _
    $region3: #{reward_predictor_forward.1} parent=1 // pred_check_branch
      %15 = sbr.rel (0) target = $region5
    $region4: #{reward_predictor_forward.1} parent=1 // pred_region
      _
    $region5: #{reward_predictor_forward.1} parent=1 // pred_fallthru
      _
    // Predicated region
    $region6: #{reward_predictor_forward.1} parent=1 // pred_check
      _
    $region7: #{reward_predictor_forward.1} parent=1 // pred_check_branch
      %17 = sbr.rel (0) target = $region9
    $region8: #{reward_predictor_forward.1} parent=1 // pred_region
      _
    $region9: #{reward_predictor_forward.1} parent=1 // pred_fallthru
      _
    // Predicated region
    $region10: #{reward_predictor_forward.1} parent=1 // pred_check
      _
    $region11: #{reward_predictor_forward.1} parent=1 // pred_check_branch
      %19 = sbr.rel (0) target = $region13
    $region12: #{reward_predictor_forward.1} parent=1 // pred_region
      %s21 = ssub.s32 1024, 1024
      %22 = vsyncadd [#allocation3], %s21
      %s23 = sshll.u32 [#allocation2], 4
      %s24 = int_to_ptr.vmem [resolvable:$true] %s23
      %29 = dma.hbm_to_vmem [thread:$0]  %s2, 1024, %s24, [#allocation3], 128, 128, 8
    $region13: #{reward_predictor_forward.1} parent=1 // pred_fallthru
      _
    // Predicated region
    $region14: #{reward_predictor_forward.1} parent=1 // pred_check
      _
    $region15: #{reward_predictor_forward.1} parent=1 // pred_check_branch
      %31 = sbr.rel (0) target = $region17
    $region16: #{reward_predictor_forward.1} parent=1 // pred_region
      _
    $region17: #{reward_predictor_forward.1} parent=1 // pred_fallthru
      _
    // Predicated region
    $region18: #{reward_predictor_forward.1} parent=1 // pred_check
      _
    $region19: #{reward_predictor_forward.1} parent=1 // pred_check_branch
      %33 = sbr.rel (0) target = $region21
    $region20: #{reward_predictor_forward.1} parent=1 // pred_region
      _
    $region21: #{reward_predictor_forward.1} parent=1 // pred_fallthru
      _
    // Predicated region
    $region22: #{reward_predictor_forward.1} parent=1 // pred_check
      _
    $region23: #{reward_predictor_forward.1} parent=1 // pred_check_branch
      %35 = sbr.rel (0) target = $region25
    $region24: #{reward_predictor_forward.1} parent=1 // pred_region
      _
    $region25: #{reward_predictor_forward.1} parent=1 // pred_fallthru
      _
    // Predicated region
    $region26: #{reward_predictor_forward.1} parent=1 // pred_check
      _
    $region27: #{reward_predictor_forward.1} parent=1 // pred_check_branch
      %37 = sbr.rel (0) target = $region29
    $region28: #{reward_predictor_forward.1} parent=1 // pred_region
      _
    $region29: #{reward_predictor_forward.1} parent=1 // pred_fallthru
      _
    // Predicated region
    $region30: #{reward_predictor_forward.1} parent=1 // pred_check
      _
    $region31: #{reward_predictor_forward.1} parent=1 // pred_check_branch
      %39 = sbr.rel (0) target = $region33
    $region32: #{reward_predictor_forward.1} parent=1 // pred_region
      _
    $region33: #{reward_predictor_forward.1} parent=1 // pred_fallthru
      _
    // Predicated region
    $region34: #{reward_predictor_forward.1} parent=1 // pred_check
      _
    $region35: #{reward_predictor_forward.1} parent=1 // pred_check_branch
      %41 = sbr.rel (0) target = $region37
    $region36: #{reward_predictor_forward.1} parent=1 // pred_region
      %42 = dma.done [#allocation3], 1024
    $region37: #{reward_predictor_forward.1} parent=1 // pred_fallthru
      _
    %v43 = vld [vmem:[%s0] sm:$0xff]
    %v44 = vld [vmem:[%s0 + $0x8] sm:$0xff]
    %v45 = vld [vmem:[%s1] sm:$0xff]
    %v46 = vld [vmem:[%s1 + $0x8] sm:$0xff]
    %v47 = vld [vmem:[%s3] sm:$0x7]
    %v48 = vld [vmem:[#allocation2] sm:$0xff]
    %v49 = vld [vmem:[#allocation2 + $0x8] sm:$0xff]
    %v50 = vld [vmem:[#allocation2 + $0x10] sm:$0xff]
    %v51 = vld [vmem:[#allocation2 + $0x18] sm:$0xff]
    %v52 = vld [vmem:[#allocation2 + $0x20] sm:$0xff]
    %v53 = vld [vmem:[#allocation2 + $0x28] sm:$0xff]
    %v54 = vld [vmem:[#allocation2 + $0x30] sm:$0xff]
    %v55 = vld [vmem:[#allocation2 + $0x38] sm:$0xff]
    %v56 = vlaneseq
    %v57 = vshrl.u32 %v56, 7
    %v58 = vsub.s32 0, %v57
    %v59 = vrot.slane %v47, %v58
    %vm60 = vcmask 523264
    %v62 = vsel %vm60, %v43, 0
    %v65 = vsel %vm60, %v44, 0
    %67 = vmatprep.subr.mxu0 0.0
    %68 = vmatpush1.msra.mxu0 %v48
    %69 = vmatprep.subr.mxu0 0.0
    %70 = vmatpush1.msra.mxu0 %v49
    %71 = vmatprep.subr.mxu0 0.0
    %72 = vmatpush1.msra.mxu0 %v50
    %73 = vmatprep.subr.mxu0 0.0
    %74 = vmatpush1.msra.mxu0 %v51
    %75 = vmatprep.subr.mxu0 0.0
    %76 = vmatpush1.msra.mxu0 %v52
    %77 = vmatprep.subr.mxu0 0.0
    %78 = vmatpush1.msra.mxu0 %v53
    %79 = vmatprep.subr.mxu0 0.0
    %80 = vmatpush1.msra.mxu0 %v54
    %81 = vmatprep.subr.mxu0 0.0
    %82 = vmatpush1.msra.mxu0 %v55
    %83 = vmatprep.subr.mxu0 0.0
    %84 = vmatpush1.msra.mxu0 0.0
    %85 = vmatprep.subr.mxu0 0.0
    %86 = vmatpush1.msra.mxu0 0.0
    %87 = vmatprep.subr.mxu0 0.0
    %88 = vmatpush1.msra.mxu0 0.0
    %89 = vmatprep.subr.mxu0 0.0
    %90 = vmatpush1.msra.mxu0 0.0
    %91 = vmatprep.subr.mxu0 0.0
    %92 = vmatpush1.msra.mxu0 0.0
    %93 = vmatprep.subr.mxu0 0.0
    %94 = vmatpush1.msra.mxu0 0.0
    %95 = vmatprep.subr.mxu0 0.0
    %96 = vmatpush1.msra.mxu0 0.0
    %97 = vmatprep.subr.mxu0 0.0
    %98 = vmatpush1.msra.mxu0 0.0
    %99 = vmatprep.subr.mxu0 0.0
    %100 = vmatpush1.msra.mxu0 0.0
    %101 = vmatprep.subr.mxu0 0.0
    %102 = vmatpush1.msra.mxu0 0.0
    %103 = vmatprep.subr.mxu0 0.0
    %104 = vmatpush1.msra.mxu0 0.0
    %105 = vmatprep.subr.mxu0 0.0
    %106 = vmatpush1.msra.mxu0 0.0
    %107 = vmatprep.subr.mxu0 0.0
    %108 = vmatpush1.msra.mxu0 0.0
    %109 = vmatprep.subr.mxu0 0.0
    %110 = vmatpush1.msra.mxu0 0.0
    %111 = vmatprep.subr.mxu0 0.0
    %112 = vmatpush1.msra.mxu0 0.0
    %113 = vmatprep.subr.mxu0 0.0
    %114 = vmatpush1.msra.mxu0 0.0
    %115 = vmatprep.subr.mxu0 0.0
    %116 = vmatpush1.msra.mxu0 0.0
    %117 = vmatprep.subr.mxu0 0.0
    %118 = vmatpush1.msra.mxu0 0.0
    %119 = vmatprep.subr.mxu0 0.0
    %120 = vmatpush1.msra.mxu0 0.0
    %121 = vmatprep.subr.mxu0 0.0
    %122 = vmatpush1.msra.mxu0 0.0
    %123 = vmatprep.subr.mxu0 0.0
    %124 = vmatpush1.msra.mxu0 0.0
    %125 = vmatprep.subr.mxu0 0.0
    %126 = vmatpush1.msra.mxu0 0.0
    %127 = vmatprep.subr.mxu0 0.0
    %128 = vmatpush1.msra.mxu0 0.0
    %129 = vmatprep.subr.mxu0 0.0
    %130 = vmatpush1.msra.mxu0 0.0
    %131 = vmatprep.mubr.f32.mxu0 0.0
    %132 = vmatmul.mubr.f32.gmra.mrb[0].mxu0 %v62
    %v133 = vpop.f32.mrb[0].mxu0
    %v134 = vadd.f32 %v59, %v133
    %v135 = vpop.f32.mrb[0].mxu0
    %136 = vmatprep.mubr.f32.mxu0 0.0
    %137 = vmatmul.mubr.f32.gmra.mrb[0].mxu0 %v65
    %v138 = vpop.f32.mrb[0].mxu0
    %v139 = vadd.f32 %v59, %v138
    %v140 = vpop.f32.mrb[0].mxu0
    %141 = vdwg.mxu0
    %vm142 = vcmask 130048
    %v144 = vsel %vm142, %v45, 0
    %v147 = vsel %vm142, %v46, 0
    %149 = vmatprep.subr.mxu0 0.0
    %150 = vmatpush1.msra.mxu0 %v134
    %151 = vmatprep.subr.mxu0 0.0
    %152 = vmatpush1.msra.mxu0 %v139
    %153 = vmatprep.subr.mxu0 0.0
    %154 = vmatpush1.msra.mxu0 0.0
    %155 = vmatprep.subr.mxu0 0.0
    %156 = vmatpush1.msra.mxu0 0.0
    %157 = vmatprep.subr.mxu0 0.0
    %158 = vmatpush1.msra.mxu0 0.0
    %159 = vmatprep.subr.mxu0 0.0
    %160 = vmatpush1.msra.mxu0 0.0
    %161 = vmatprep.subr.mxu0 0.0
    %162 = vmatpush1.msra.mxu0 0.0
    %163 = vmatprep.subr.mxu0 0.0
    %164 = vmatpush1.msra.mxu0 0.0
    %165 = vmatprep.subr.mxu0 0.0
    %166 = vmatpush1.msra.mxu0 0.0
    %167 = vmatprep.subr.mxu0 0.0
    %168 = vmatpush1.msra.mxu0 0.0
    %169 = vmatprep.subr.mxu0 0.0
    %170 = vmatpush1.msra.mxu0 0.0
    %171 = vmatprep.subr.mxu0 0.0
    %172 = vmatpush1.msra.mxu0 0.0
    %173 = vmatprep.subr.mxu0 0.0
    %174 = vmatpush1.msra.mxu0 0.0
    %175 = vmatprep.subr.mxu0 0.0
    %176 = vmatpush1.msra.mxu0 0.0
    %177 = vmatprep.subr.mxu0 0.0
    %178 = vmatpush1.msra.mxu0 0.0
    %179 = vmatprep.subr.mxu0 0.0
    %180 = vmatpush1.msra.mxu0 0.0
    %181 = vmatprep.subr.mxu0 0.0
    %182 = vmatpush1.msra.mxu0 0.0
    %183 = vmatprep.subr.mxu0 0.0
    %184 = vmatpush1.msra.mxu0 0.0
    %185 = vmatprep.subr.mxu0 0.0
    %186 = vmatpush1.msra.mxu0 0.0
    %187 = vmatprep.subr.mxu0 0.0
    %188 = vmatpush1.msra.mxu0 0.0
    %189 = vmatprep.subr.mxu0 0.0
    %190 = vmatpush1.msra.mxu0 0.0
    %191 = vmatprep.subr.mxu0 0.0
    %192 = vmatpush1.msra.mxu0 0.0
    %193 = vmatprep.subr.mxu0 0.0
    %194 = vmatpush1.msra.mxu0 0.0
    %195 = vmatprep.subr.mxu0 0.0
    %196 = vmatpush1.msra.mxu0 0.0
    %197 = vmatprep.subr.mxu0 0.0
    %198 = vmatpush1.msra.mxu0 0.0
    %199 = vmatprep.subr.mxu0 0.0
    %200 = vmatpush1.msra.mxu0 0.0
    %201 = vmatprep.subr.mxu0 0.0
    %202 = vmatpush1.msra.mxu0 0.0
    %203 = vmatprep.subr.mxu0 0.0
    %204 = vmatpush1.msra.mxu0 0.0
    %205 = vmatprep.subr.mxu0 0.0
    %206 = vmatpush1.msra.mxu0 0.0
    %207 = vmatprep.subr.mxu0 0.0
    %208 = vmatpush1.msra.mxu0 0.0
    %209 = vmatprep.subr.mxu0 0.0
    %210 = vmatpush1.msra.mxu0 0.0
    %211 = vmatprep.subr.mxu0 0.0
    %212 = vmatpush1.msra.mxu0 0.0
    %213 = vmatprep.mubr.f32.mxu0 0.0
    %214 = vmatmul.mubr.f32.gmra.mrb[0].mxu0 %v144
    %v215 = vpop.f32.mrb[0].mxu0
    %v216 = vadd.f32 0.0, %v215
    %v217 = vpop.f32.mrb[0].mxu0
    %218 = vmatprep.mubr.f32.mxu0 0.0
    %219 = vmatmul.mubr.f32.gmra.mrb[0].mxu0 %v147
    %v220 = vpop.f32.mrb[0].mxu0
    %v221 = vadd.f32 0.0, %v220
    %v222 = vpop.f32.mrb[0].mxu0
    %223 = vdwg.mxu0
    %v224 = vsub.f32 %v134, %v216
    %v225 = vsub.f32 %v139, %v221
    %v226 = vmul.f32 %v224, %v224
    %v227 = vmul.f32 %v225, %v225
    %228 = vmatprep.subr.mxu0 0.0
    %229 = vmatpush1.msra.mxu0 %v226
    %230 = vmatprep.subr.mxu0 0.0
    %231 = vmatpush1.msra.mxu0 %v227
    %232 = vmatprep.subr.mxu0 0.0
    %233 = vmatpush1.msra.mxu0 0.0
    %234 = vmatprep.subr.mxu0 0.0
    %235 = vmatpush1.msra.mxu0 0.0
    %236 = vmatprep.subr.mxu0 0.0
    %237 = vmatpush1.msra.mxu0 0.0
    %238 = vmatprep.subr.mxu0 0.0
    %239 = vmatpush1.msra.mxu0 0.0
    %240 = vmatprep.subr.mxu0 0.0
    %241 = vmatpush1.msra.mxu0 0.0
    %242 = vmatprep.subr.mxu0 0.0
    %243 = vmatpush1.msra.mxu0 0.0
    %244 = vmatprep.subr.mxu0 0.0
    %245 = vmatpush1.msra.mxu0 0.0
    %246 = vmatprep.subr.mxu0 0.0
    %247 = vmatpush1.msra.mxu0 0.0
    %248 = vmatprep.subr.mxu0 0.0
    %249 = vmatpush1.msra.mxu0 0.0
    %250 = vmatprep.subr.mxu0 0.0
    %251 = vmatpush1.msra.mxu0 0.0
    %252 = vmatprep.subr.mxu0 0.0
    %253 = vmatpush1.msra.mxu0 0.0
    %254 = vmatprep.subr.mxu0 0.0
    %255 = vmatpush1.msra.mxu0 0.0
    %256 = vmatprep.subr.mxu0 0.0
    %257 = vmatpush1.msra.mxu0 0.0
    %258 = vmatprep.subr.mxu0 0.0
    %259 = vmatpush1.msra.mxu0 0.0
    %260 = vmatprep.subr.mxu0 0.0
    %261 = vmatpush1.msra.mxu0 0.0
    %262 = vmatprep.subr.mxu0 0.0
    %263 = vmatpush1.msra.mxu0 0.0
    %264 = vmatprep.subr.mxu0 0.0
    %265 = vmatpush1.msra.mxu0 0.0
    %266 = vmatprep.subr.mxu0 0.0
    %267 = vmatpush1.msra.mxu0 0.0
    %268 = vmatprep.subr.mxu0 0.0
    %269 = vmatpush1.msra.mxu0 0.0
    %270 = vmatprep.subr.mxu0 0.0
    %271 = vmatpush1.msra.mxu0 0.0
    %272 = vmatprep.subr.mxu0 0.0
    %273 = vmatpush1.msra.mxu0 0.0
    %274 = vmatprep.subr.mxu0 0.0
    %275 = vmatpush1.msra.mxu0 0.0
    %276 = vmatprep.subr.mxu0 0.0
    %277 = vmatpush1.msra.mxu0 0.0
    %278 = vmatprep.subr.mxu0 0.0
    %279 = vmatpush1.msra.mxu0 0.0
    %280 = vmatprep.subr.mxu0 0.0
    %281 = vmatpush1.msra.mxu0 0.0
    %282 = vmatprep.subr.mxu0 0.0
    %283 = vmatpush1.msra.mxu0 0.0
    %284 = vmatprep.subr.mxu0 0.0
    %285 = vmatpush1.msra.mxu0 0.0
    %286 = vmatprep.subr.mxu0 0.0
    %287 = vmatpush1.msra.mxu0 0.0
    %288 = vmatprep.subr.mxu0 0.0
    %289 = vmatpush1.msra.mxu0 0.0
    %290 = vmatprep.subr.mxu0 0.0
    %291 = vmatpush1.msra.mxu0 0.0
    %292 = vmatprep.mubr.f32.mxu0 0.0
    %293 = vmatmul.mubr.f32.gmra.mrb[0].mxu0 %v144
    %v294 = vpop.f32.mrb[0].mxu0
    %v295 = vadd.f32 1e-05, %v294
    %v296 = vpop.f32.mrb[0].mxu0
    %297 = vmatprep.mubr.f32.mxu0 0.0
    %298 = vmatmul.mubr.f32.gmra.mrb[0].mxu0 %v147
    %v299 = vpop.f32.mrb[0].mxu0
    %v300 = vadd.f32 1e-05, %v299
    %v301 = vpop.f32.mrb[0].mxu0
    %302 = vdwg.mxu0
    %v303 = vrsqrt.pop %v295
    %v304 = vrsqrt.pop %v300
    %v305 = vmul.f32 %v224, %v303
    %v306 = vmul.f32 %v225, %v304
    %v307 = vlaneseq
    %v308 = vshrl.u32 %v307, 7
    %v309 = vsub.s32 1, %v308
    %v310 = vrot.slane %v47, %v309
    %v311 = vmul.f32 %v305, %v310
    %v312 = vmul.f32 %v306, %v310
    %v313 = vlaneseq
    %v314 = vshrl.u32 %v313, 7
    %v315 = vsub.s32 2, %v314
    %v316 = vrot.slane %v47, %v315
    %v317 = vadd.f32 %v311, %v316
    %v318 = vadd.f32 %v312, %v316
    %v319 = vmax.f32 %v317, 0.0
    %v320 = vmax.f32 %v318, 0.0
    %v321 = vld [vmem:[%s5] sm:$0x7]
    %v322 = vld [vmem:[%s4] sm:$0xff]
    %v323 = vld [vmem:[%s4 + $0x8] sm:$0xff]
    %v324 = vld [vmem:[%s4 + $0x10] sm:$0xff]
    %v325 = vld [vmem:[%s4 + $0x18] sm:$0xff]
    %v326 = vld [vmem:[%s4 + $0x20] sm:$0xff]
    %v327 = vld [vmem:[%s4 + $0x28] sm:$0xff]
    %v328 = vld [vmem:[%s4 + $0x30] sm:$0xff]
    %v329 = vld [vmem:[%s4 + $0x38] sm:$0xff]
    %v330 = vld [vmem:[%s4 + $0x40] sm:$0xff]
    %v331 = vld [vmem:[%s4 + $0x48] sm:$0xff]
    %v332 = vld [vmem:[%s4 + $0x50] sm:$0xff]
    %v333 = vld [vmem:[%s4 + $0x58] sm:$0xff]
    %v334 = vld [vmem:[%s4 + $0x60] sm:$0xff]
    %v335 = vld [vmem:[%s4 + $0x68] sm:$0xff]
    %v336 = vld [vmem:[%s4 + $0x70] sm:$0xff]
    %v337 = vld [vmem:[%s4 + $0x78] sm:$0xff]
    %v338 = vlaneseq
    %v339 = vshrl.u32 %v338, 7
    %v340 = vsub.s32 0, %v339
    %v341 = vrot.slane %v321, %v340
    %342 = vmatprep.subr.mxu0 0.0
    %343 = vmatpush1.msra.mxu0 %v322
    %344 = vmatprep.subr.mxu0 0.0
    %345 = vmatpush1.msra.mxu0 %v323
    %346 = vmatprep.subr.mxu0 0.0
    %347 = vmatpush1.msra.mxu0 %v324
    %348 = vmatprep.subr.mxu0 0.0
    %349 = vmatpush1.msra.mxu0 %v325
    %350 = vmatprep.subr.mxu0 0.0
    %351 = vmatpush1.msra.mxu0 %v326
    %352 = vmatprep.subr.mxu0 0.0
    %353 = vmatpush1.msra.mxu0 %v327
    %354 = vmatprep.subr.mxu0 0.0
    %355 = vmatpush1.msra.mxu0 %v328
    %356 = vmatprep.subr.mxu0 0.0
    %357 = vmatpush1.msra.mxu0 %v329
    %358 = vmatprep.subr.mxu0 0.0
    %359 = vmatpush1.msra.mxu0 %v330
    %360 = vmatprep.subr.mxu0 0.0
    %361 = vmatpush1.msra.mxu0 %v331
    %362 = vmatprep.subr.mxu0 0.0
    %363 = vmatpush1.msra.mxu0 %v332
    %364 = vmatprep.subr.mxu0 0.0
    %365 = vmatpush1.msra.mxu0 %v333
    %366 = vmatprep.subr.mxu0 0.0
    %367 = vmatpush1.msra.mxu0 %v334
    %368 = vmatprep.subr.mxu0 0.0
    %369 = vmatpush1.msra.mxu0 %v335
    %370 = vmatprep.subr.mxu0 0.0
    %371 = vmatpush1.msra.mxu0 %v336
    %372 = vmatprep.subr.mxu0 0.0
    %373 = vmatpush1.msra.mxu0 %v337
    %374 = vmatprep.subr.mxu0 0.0
    %375 = vmatpush1.msra.mxu0 0.0
    %376 = vmatprep.subr.mxu0 0.0
    %377 = vmatpush1.msra.mxu0 0.0
    %378 = vmatprep.subr.mxu0 0.0
    %379 = vmatpush1.msra.mxu0 0.0
    %380 = vmatprep.subr.mxu0 0.0
    %381 = vmatpush1.msra.mxu0 0.0
    %382 = vmatprep.subr.mxu0 0.0
    %383 = vmatpush1.msra.mxu0 0.0
    %384 = vmatprep.subr.mxu0 0.0
    %385 = vmatpush1.msra.mxu0 0.0
    %386 = vmatprep.subr.mxu0 0.0
    %387 = vmatpush1.msra.mxu0 0.0
    %388 = vmatprep.subr.mxu0 0.0
    %389 = vmatpush1.msra.mxu0 0.0
    %390 = vmatprep.subr.mxu0 0.0
    %391 = vmatpush1.msra.mxu0 0.0
    %392 = vmatprep.subr.mxu0 0.0
    %393 = vmatpush1.msra.mxu0 0.0
    %394 = vmatprep.subr.mxu0 0.0
    %395 = vmatpush1.msra.mxu0 0.0
    %396 = vmatprep.subr.mxu0 0.0
    %397 = vmatpush1.msra.mxu0 0.0
    %398 = vmatprep.subr.mxu0 0.0
    %399 = vmatpush1.msra.mxu0 0.0
    %400 = vmatprep.subr.mxu0 0.0
    %401 = vmatpush1.msra.mxu0 0.0
    %402 = vmatprep.subr.mxu0 0.0
    %403 = vmatpush1.msra.mxu0 0.0
    %404 = vmatprep.subr.mxu0 0.0
    %405 = vmatpush1.msra.mxu0 0.0
    %406 = vmatprep.mubr.f32.mxu0 0.0
    %407 = vmatmul.mubr.f32.gmra.mrb[0].mxu0 %v319
    %v408 = vpop.f32.mrb[0].mxu0
    %v409 = vadd.f32 %v341, %v408
    %v410 = vpop.f32.mrb[0].mxu0
    %411 = vmatprep.mubr.f32.mxu0 0.0
    %412 = vmatmul.mubr.f32.gmra.mrb[0].mxu0 %v320
    %v413 = vpop.f32.mrb[0].mxu0
    %v414 = vadd.f32 %v341, %v413
    %v415 = vpop.f32.mrb[0].mxu0
    %416 = vdwg.mxu0
    %417 = vmatprep.subr.mxu0 0.0
    %418 = vmatpush1.msra.mxu0 %v409
    %419 = vmatprep.subr.mxu0 0.0
    %420 = vmatpush1.msra.mxu0 %v414
    %421 = vmatprep.subr.mxu0 0.0
    %422 = vmatpush1.msra.mxu0 0.0
    %423 = vmatprep.subr.mxu0 0.0
    %424 = vmatpush1.msra.mxu0 0.0
    %425 = vmatprep.subr.mxu0 0.0
    %426 = vmatpush1.msra.mxu0 0.0
    %427 = vmatprep.subr.mxu0 0.0
    %428 = vmatpush1.msra.mxu0 0.0
    %429 = vmatprep.subr.mxu0 0.0
    %430 = vmatpush1.msra.mxu0 0.0
    %431 = vmatprep.subr.mxu0 0.0
    %432 = vmatpush1.msra.mxu0 0.0
    %433 = vmatprep.subr.mxu0 0.0
    %434 = vmatpush1.msra.mxu0 0.0
    %435 = vmatprep.subr.mxu0 0.0
    %436 = vmatpush1.msra.mxu0 0.0
    %437 = vmatprep.subr.mxu0 0.0
    %438 = vmatpush1.msra.mxu0 0.0
    %439 = vmatprep.subr.mxu0 0.0
    %440 = vmatpush1.msra.mxu0 0.0
    %441 = vmatprep.subr.mxu0 0.0
    %442 = vmatpush1.msra.mxu0 0.0
    %443 = vmatprep.subr.mxu0 0.0
    %444 = vmatpush1.msra.mxu0 0.0
    %445 = vmatprep.subr.mxu0 0.0
    %446 = vmatpush1.msra.mxu0 0.0
    %447 = vmatprep.subr.mxu0 0.0
    %448 = vmatpush1.msra.mxu0 0.0
    %449 = vmatprep.subr.mxu0 0.0
    %450 = vmatpush1.msra.mxu0 0.0
    %451 = vmatprep.subr.mxu0 0.0
    %452 = vmatpush1.msra.mxu0 0.0
    %453 = vmatprep.subr.mxu0 0.0
    %454 = vmatpush1.msra.mxu0 0.0
    %455 = vmatprep.subr.mxu0 0.0
    %456 = vmatpush1.msra.mxu0 0.0
    %457 = vmatprep.subr.mxu0 0.0
    %458 = vmatpush1.msra.mxu0 0.0
    %459 = vmatprep.subr.mxu0 0.0
    %460 = vmatpush1.msra.mxu0 0.0
    %461 = vmatprep.subr.mxu0 0.0
    %462 = vmatpush1.msra.mxu0 0.0
    %463 = vmatprep.subr.mxu0 0.0
    %464 = vmatpush1.msra.mxu0 0.0
    %465 = vmatprep.subr.mxu0 0.0
    %466 = vmatpush1.msra.mxu0 0.0
    %467 = vmatprep.subr.mxu0 0.0
    %468 = vmatpush1.msra.mxu0 0.0
    %469 = vmatprep.subr.mxu0 0.0
    %470 = vmatpush1.msra.mxu0 0.0
    %471 = vmatprep.subr.mxu0 0.0
    %472 = vmatpush1.msra.mxu0 0.0
    %473 = vmatprep.subr.mxu0 0.0
    %474 = vmatpush1.msra.mxu0 0.0
    %475 = vmatprep.subr.mxu0 0.0
    %476 = vmatpush1.msra.mxu0 0.0
    %477 = vmatprep.subr.mxu0 0.0
    %478 = vmatpush1.msra.mxu0 0.0
    %479 = vmatprep.subr.mxu0 0.0
    %480 = vmatpush1.msra.mxu0 0.0
    %481 = vmatprep.mubr.f32.mxu0 0.0
    %482 = vmatmul.mubr.f32.gmra.mrb[0].mxu0 %v144
    %v483 = vpop.f32.mrb[0].mxu0
    %v484 = vadd.f32 0.0, %v483
    %v485 = vpop.f32.mrb[0].mxu0
    %486 = vmatprep.mubr.f32.mxu0 0.0
    %487 = vmatmul.mubr.f32.gmra.mrb[0].mxu0 %v147
    %v488 = vpop.f32.mrb[0].mxu0
    %v489 = vadd.f32 0.0, %v488
    %v490 = vpop.f32.mrb[0].mxu0
    %491 = vdwg.mxu0
    %v492 = vsub.f32 %v409, %v484
    %v493 = vsub.f32 %v414, %v489
    %v494 = vmul.f32 %v492, %v492
    %v495 = vmul.f32 %v493, %v493
    %496 = vmatprep.subr.mxu0 0.0
    %497 = vmatpush1.msra.mxu0 %v494
    %498 = vmatprep.subr.mxu0 0.0
    %499 = vmatpush1.msra.mxu0 %v495
    %500 = vmatprep.subr.mxu0 0.0
    %501 = vmatpush1.msra.mxu0 0.0
    %502 = vmatprep.subr.mxu0 0.0
    %503 = vmatpush1.msra.mxu0 0.0
    %504 = vmatprep.subr.mxu0 0.0
    %505 = vmatpush1.msra.mxu0 0.0
    %506 = vmatprep.subr.mxu0 0.0
    %507 = vmatpush1.msra.mxu0 0.0
    %508 = vmatprep.subr.mxu0 0.0
    %509 = vmatpush1.msra.mxu0 0.0
    %510 = vmatprep.subr.mxu0 0.0
    %511 = vmatpush1.msra.mxu0 0.0
    %512 = vmatprep.subr.mxu0 0.0
    %513 = vmatpush1.msra.mxu0 0.0
    %514 = vmatprep.subr.mxu0 0.0
    %515 = vmatpush1.msra.mxu0 0.0
    %516 = vmatprep.subr.mxu0 0.0
    %517 = vmatpush1.msra.mxu0 0.0
    %518 = vmatprep.subr.mxu0 0.0
    %519 = vmatpush1.msra.mxu0 0.0
    %520 = vmatprep.subr.mxu0 0.0
    %521 = vmatpush1.msra.mxu0 0.0
    %522 = vmatprep.subr.mxu0 0.0
    %523 = vmatpush1.msra.mxu0 0.0
    %524 = vmatprep.subr.mxu0 0.0
    %525 = vmatpush1.msra.mxu0 0.0
    %526 = vmatprep.subr.mxu0 0.0
    %527 = vmatpush1.msra.mxu0 0.0
    %528 = vmatprep.subr.mxu0 0.0
    %529 = vmatpush1.msra.mxu0 0.0
    %530 = vmatprep.subr.mxu0 0.0
    %531 = vmatpush1.msra.mxu0 0.0
    %532 = vmatprep.subr.mxu0 0.0
    %533 = vmatpush1.msra.mxu0 0.0
    %534 = vmatprep.subr.mxu0 0.0
    %535 = vmatpush1.msra.mxu0 0.0
    %536 = vmatprep.subr.mxu0 0.0
    %537 = vmatpush1.msra.mxu0 0.0
    %538 = vmatprep.subr.mxu0 0.0
    %539 = vmatpush1.msra.mxu0 0.0
    %540 = vmatprep.subr.mxu0 0.0
    %541 = vmatpush1.msra.mxu0 0.0
    %542 = vmatprep.subr.mxu0 0.0
    %543 = vmatpush1.msra.mxu0 0.0
    %544 = vmatprep.subr.mxu0 0.0
    %545 = vmatpush1.msra.mxu0 0.0
    %546 = vmatprep.subr.mxu0 0.0
    %547 = vmatpush1.msra.mxu0 0.0
    %548 = vmatprep.subr.mxu0 0.0
    %549 = vmatpush1.msra.mxu0 0.0
    %550 = vmatprep.subr.mxu0 0.0
    %551 = vmatpush1.msra.mxu0 0.0
    %552 = vmatprep.subr.mxu0 0.0
    %553 = vmatpush1.msra.mxu0 0.0
    %554 = vmatprep.subr.mxu0 0.0
    %555 = vmatpush1.msra.mxu0 0.0
    %556 = vmatprep.subr.mxu0 0.0
    %557 = vmatpush1.msra.mxu0 0.0
    %558 = vmatprep.subr.mxu0 0.0
    %559 = vmatpush1.msra.mxu0 0.0
    %560 = vmatprep.mubr.f32.mxu0 0.0
    %561 = vmatmul.mubr.f32.gmra.mrb[0].mxu0 %v144
    %v562 = vpop.f32.mrb[0].mxu0
    %v563 = vadd.f32 1e-05, %v562
    %v564 = vpop.f32.mrb[0].mxu0
    %565 = vmatprep.mubr.f32.mxu0 0.0
    %566 = vmatmul.mubr.f32.gmra.mrb[0].mxu0 %v147
    %v567 = vpop.f32.mrb[0].mxu0
    %v568 = vadd.f32 1e-05, %v567
    %v569 = vpop.f32.mrb[0].mxu0
    %570 = vdwg.mxu0
    %v571 = vrsqrt.pop %v563
    %v572 = vrsqrt.pop %v568
    %v573 = vmul.f32 %v492, %v571
    %v574 = vmul.f32 %v493, %v572
    %v575 = vlaneseq
    %v576 = vshrl.u32 %v575, 7
    %v577 = vsub.s32 1, %v576
    %v578 = vrot.slane %v321, %v577
    %v579 = vmul.f32 %v573, %v578
    %v580 = vmul.f32 %v574, %v578
    %v581 = vlaneseq
    %v582 = vshrl.u32 %v581, 7
    %v583 = vsub.s32 2, %v582
    %v584 = vrot.slane %v321, %v583
    %v585 = vadd.f32 %v579, %v584
    %v586 = vadd.f32 %v580, %v584
    %v587 = vmax.f32 %v585, 0.0
    %v588 = vmax.f32 %v586, 0.0
    %v589 = vld [vmem:[%s6] sm:$0xff]
    %v590 = vld [vmem:[%s6 + $0x8] sm:$0xff]
    %v591 = vld [vmem:[%s6 + $0x10] sm:$0xff]
    %v592 = vld [vmem:[%s6 + $0x18] sm:$0xff]
    %v593 = vld [vmem:[%s6 + $0x20] sm:$0xff]
    %v594 = vld [vmem:[%s6 + $0x28] sm:$0xff]
    %v595 = vld [vmem:[%s6 + $0x30] sm:$0xff]
    %v596 = vld [vmem:[%s6 + $0x38] sm:$0xff]
    %v597 = vld [vmem:[%s6 + $0x40] sm:$0xff]
    %v598 = vld [vmem:[%s6 + $0x48] sm:$0xff]
    %v599 = vld [vmem:[%s6 + $0x50] sm:$0xff]
    %v600 = vld [vmem:[%s6 + $0x58] sm:$0xff]
    %v601 = vld [vmem:[%s6 + $0x60] sm:$0xff]
    %v602 = vld [vmem:[%s6 + $0x68] sm:$0xff]
    %v603 = vld [vmem:[%s6 + $0x70] sm:$0xff]
    %v604 = vld [vmem:[%s6 + $0x78] sm:$0xff]
    %v605 = vld [vmem:[%s7] sm:$0x1]
    %v607 = vlaneseq
    %v608 = vshrl.u32 %v607, 7
    %v609 = vsub.s32 0, %v608
    %v610 = vrot.slane %v605, %v609
    %612 = vmatprep.subr.mxu0 0.0
    %613 = vmatpush1.msra.mxu0 %v589
    %614 = vmatprep.subr.mxu0 0.0
    %615 = vmatpush1.msra.mxu0 %v590
    %616 = vmatprep.subr.mxu0 0.0
    %617 = vmatpush1.msra.mxu0 %v591
    %618 = vmatprep.subr.mxu0 0.0
    %619 = vmatpush1.msra.mxu0 %v592
    %620 = vmatprep.subr.mxu0 0.0
    %621 = vmatpush1.msra.mxu0 %v593
    %622 = vmatprep.subr.mxu0 0.0
    %623 = vmatpush1.msra.mxu0 %v594
    %624 = vmatprep.subr.mxu0 0.0
    %625 = vmatpush1.msra.mxu0 %v595
    %626 = vmatprep.subr.mxu0 0.0
    %627 = vmatpush1.msra.mxu0 %v596
    %628 = vmatprep.subr.mxu0 0.0
    %629 = vmatpush1.msra.mxu0 %v597
    %630 = vmatprep.subr.mxu0 0.0
    %631 = vmatpush1.msra.mxu0 %v598
    %632 = vmatprep.subr.mxu0 0.0
    %633 = vmatpush1.msra.mxu0 %v599
    %634 = vmatprep.subr.mxu0 0.0
    %635 = vmatpush1.msra.mxu0 %v600
    %636 = vmatprep.subr.mxu0 0.0
    %637 = vmatpush1.msra.mxu0 %v601
    %638 = vmatprep.subr.mxu0 0.0
    %639 = vmatpush1.msra.mxu0 %v602
    %640 = vmatprep.subr.mxu0 0.0
    %641 = vmatpush1.msra.mxu0 %v603
    %642 = vmatprep.subr.mxu0 0.0
    %643 = vmatpush1.msra.mxu0 %v604
    %644 = vmatprep.subr.mxu0 0.0
    %645 = vmatpush1.msra.mxu0 0.0
    %646 = vmatprep.subr.mxu0 0.0
    %647 = vmatpush1.msra.mxu0 0.0
    %648 = vmatprep.subr.mxu0 0.0
    %649 = vmatpush1.msra.mxu0 0.0
    %650 = vmatprep.subr.mxu0 0.0
    %651 = vmatpush1.msra.mxu0 0.0
    %652 = vmatprep.subr.mxu0 0.0
    %653 = vmatpush1.msra.mxu0 0.0
    %654 = vmatprep.subr.mxu0 0.0
    %655 = vmatpush1.msra.mxu0 0.0
    %656 = vmatprep.subr.mxu0 0.0
    %657 = vmatpush1.msra.mxu0 0.0
    %658 = vmatprep.subr.mxu0 0.0
    %659 = vmatpush1.msra.mxu0 0.0
    %660 = vmatprep.subr.mxu0 0.0
    %661 = vmatpush1.msra.mxu0 0.0
    %662 = vmatprep.subr.mxu0 0.0
    %663 = vmatpush1.msra.mxu0 0.0
    %664 = vmatprep.subr.mxu0 0.0
    %665 = vmatpush1.msra.mxu0 0.0
    %666 = vmatprep.subr.mxu0 0.0
    %667 = vmatpush1.msra.mxu0 0.0
    %668 = vmatprep.subr.mxu0 0.0
    %669 = vmatpush1.msra.mxu0 0.0
    %670 = vmatprep.subr.mxu0 0.0
    %671 = vmatpush1.msra.mxu0 0.0
    %672 = vmatprep.subr.mxu0 0.0
    %673 = vmatpush1.msra.mxu0 0.0
    %674 = vmatprep.subr.mxu0 0.0
    %675 = vmatpush1.msra.mxu0 0.0
    %676 = vmatprep.mubr.f32.mxu0 0.0
    %677 = vmatmul.mubr.f32.gmra.mrb[0].mxu0 %v587
    %v678 = vpop.f32.mrb[0].mxu0
    %v679 = vadd.f32 %v610, %v678
    %v680 = vpop.f32.mrb[0].mxu0
    %681 = vmatprep.mubr.f32.mxu0 0.0
    %682 = vmatmul.mubr.f32.gmra.mrb[0].mxu0 %v588
    %v683 = vpop.f32.mrb[0].mxu0
    %v684 = vadd.f32 %v610, %v683
    %v685 = vpop.f32.mrb[0].mxu0
    %686 = vdwg.mxu0
    %v687 = vxor.u32 %v679, 2147483648
    %v688 = vxor.u32 %v684, 2147483648
    %v689 = vmul.f32 %v687, 1.442695
    %v690 = vpow.pop %v689
    %v691 = vmul.f32 %v688, 1.442695
    %v692 = vpow.pop %v691
    %v693 = vadd.f32 %v690, 1.0
    %v694 = vadd.f32 %v692, 1.0
    %v695 = vrcp.pop %v693
    %v696 = vmul.f32 1.0, %v695
    %v697 = vrcp.pop %v694
    %v698 = vmul.f32 1.0, %v697
    %vm699 = vcmask 31744
    %700 = vst.msk [vmem:[%s8] sm:$0xff] %vm699, %v696
    %701 = vst.msk [vmem:[%s8 + $0x8] sm:$0xff] %vm699, %v698
    // Predicated region
    $region38: #{reward_predictor_forward.1} parent=1 // pred_check
      _
    $region39: #{reward_predictor_forward.1} parent=1 // pred_check_branch
      %703 = sbr.rel (0) target = $region41
    $region40: #{reward_predictor_forward.1} parent=1 // pred_region
      _
    $region41: #{reward_predictor_forward.1} parent=1 // pred_fallthru
      _
    // Predicated region
    $region42: #{reward_predictor_forward.1} parent=1 // pred_check
      _
    $region43: #{reward_predictor_forward.1} parent=1 // pred_check_branch
      %705 = sbr.rel (0) target = $region45
    $region44: #{reward_predictor_forward.1} parent=1 // pred_region
      _
    $region45: #{reward_predictor_forward.1} parent=1 // pred_fallthru
      _
    %706 = vsyncpa [#allocation3], 1

</llo_original>
